<compile_context>
chip_gen: v6e
topology: v6e:2x2x1
jax: 0.10.0
libtpu: 0.0.40
codegen_flags: <defaults>
</compile_context>

<pallas_src>
import jax
import jax.numpy as jnp
from jax.experimental import pallas as pl
from jax.experimental.pallas import tpu as pltpu

_TILE_B = 512          # lanes per grid step (multiple of 128)
_SMALL_BATCH = 4096    # below this, plain JAX beats a pallas_call round-trip


def _falling_ode_kernel(params_ref, yt_ref, ft_ref):
    """State-major tile: yt_ref / ft_ref are (2, TILE_B) in VMEM.

    params_ref is SMEM (2,) = [w/m, k/m].
    """
    w_over_m = params_ref[0]
    k_over_m = params_ref[1]

    y1 = yt_ref[1:2, :]                         # (1, TILE_B) — y[..., 1]
    ft_ref[0:1, :] = y1                         # f[..., 0] = y[..., 1]
    ft_ref[1:2, :] = w_over_m - k_over_m * y1   # f[..., 1] = (w - k*y1)/m


def _constant_jacobian(m, k, batch):
    """df is independent of y: df[...,0,1] = 1, df[...,1,1] = -k/m."""
    neg_k_over_m = -jnp.float32(k) / jnp.float32(m)
    df2 = (jnp.zeros((2, 2), jnp.float32)
           .at[0, 1].set(1.0)
           .at[1, 1].set(neg_k_over_m))
    return jnp.broadcast_to(df2, (batch, 2, 2))


def _reference_forward(y, m, w, k):
    """Plain-JAX path: used for tiny batches and as the correctness reference."""
    y1 = y[..., 1]
    f = jnp.stack([y1, (w - k * y1) / m], axis=-1).astype(jnp.float32)
    return f, _constant_jacobian(m, k, y.shape[0])


def falling_ode_forward(t, y, m=0.25, w=8.0, k=2.0, *,
                        tile_b=_TILE_B, use_pallas=None):
    """Pallas forward.  `t` is unused (matches the PyTorch forward)."""
    del t
    y = jnp.asarray(y, dtype=jnp.float32)
    B, S = y.shape
    assert S == 2, "state dimension must be 2"

    if use_pallas is None:
        use_pallas = B >= _SMALL_BATCH
    if not use_pallas:
        # At tiny B the pallas_call launch overhead dwarfs the ~2 flops/row.
        return _reference_forward(y, m, w, k)

    # One scalar divide on the host/XLA side instead of a per-tile vector divide.
    m32 = jnp.float32(m)
    params = jnp.stack([jnp.float32(w) / m32, jnp.float32(k) / m32])   # (2,) f32

    # Lane-dense, state-major layout: (2, B_pad), batch axis on the 128 lanes.
    b_pad = pl.cdiv(B, tile_b) * tile_b
    y_t = jnp.pad(y.T, ((0, 0), (0, b_pad - B)))

    f_t = pl.pallas_call(
        _falling_ode_kernel,
        out_shape=jax.ShapeDtypeStruct((2, b_pad), jnp.float32),
        grid_spec=pltpu.PrefetchScalarGridSpec(
            num_scalar_prefetch=0,
            grid=(b_pad // tile_b,),
            in_specs=[
                pl.BlockSpec(memory_space=pltpu.MemorySpace.SMEM),     # [w/m, k/m]
                pl.BlockSpec((2, tile_b), lambda i: (0, i)),           # y (state-major)
            ],
            out_specs=pl.BlockSpec((2, tile_b), lambda i: (0, i)),     # f (state-major)
        ),
        compiler_params=pltpu.CompilerParams(
            dimension_semantics=("parallel",),   # shard tiles across TCs (v7x)
        ),
    )(params, y_t)

    f = f_t[:, :B].T                              # back to batch-major (B, 2)
    return f, _constant_jacobian(m, k, B)


if __name__ == "__main__":
    m, w, k = 0.25, 8.0, 2.0          # parameters from ORNL/TM-9912 docstring
    t = jnp.float32(0.0)              # unused by forward, kept for signature parity

    key = jax.random.PRNGKey(0)
    ok = True
    # batch=8: single (padded) tile; batch=1024: 2-step parallel grid.
    for batch in (8, 1024):
        key, sub = jax.random.split(key)
        y = jax.random.normal(sub, (batch, 2), dtype=jnp.float32)

        f, df = falling_ode_forward(t, y, m, w, k, use_pallas=True)
        jax.block_until_ready((f, df))

        f_ref, df_ref = _reference_forward(y, m, w, k)
        ok &= f.shape == (batch, 2) and df.shape == (batch, 2, 2)
        ok &= bool(jnp.allclose(f, f_ref, atol=1e-6, rtol=1e-6))
        ok &= bool(jnp.allclose(df, df_ref, atol=1e-6, rtol=1e-6))

    assert ok
    print("KERNEL_OK")
</pallas_src>

<mosaic_0001>
module attributes {stable_mosaic.version = 11 : i64} {
  func.func @_falling_ode_kernel(%arg0: i32, %arg1: memref<2xf32, #tpu.memory_space<smem>>, %arg2: memref<2x512xf32, #tpu.memory_space<vmem>>, %arg3: memref<2x512xf32, #tpu.memory_space<vmem>>) attributes {dimension_semantics = [#tpu.dimension_semantics<parallel>], iteration_bounds = array<i64: 1>, scalar_prefetch = 0 : i64, scratch_operands = 0 : i64, tpu.core_type = #tpu.core_type<tc>, window_params = [{transform_indices = @transform_0, window_bounds = array<i64: 2>}, {transform_indices = @transform_1, window_bounds = array<i64: 2, 512>}, {transform_indices = @transform_2, window_bounds = array<i64: 2, 512>}]} {
    %c0 = arith.constant 0 : index
    %0 = memref.load %arg1[%c0] : memref<2xf32, #tpu.memory_space<smem>>
    %c1 = arith.constant 1 : index
    %1 = memref.load %arg1[%c1] : memref<2xf32, #tpu.memory_space<smem>>
    %c1_0 = arith.constant 1 : index
    %c0_1 = arith.constant 0 : index
    %2 = vector.load %arg2[%c1_0, %c0_1] : memref<2x512xf32, #tpu.memory_space<vmem>>, vector<1x512xf32>
    %c0_2 = arith.constant 0 : index
    %c0_3 = arith.constant 0 : index
    %3 = vector.load %arg3[%c0_2, %c0_3] : memref<2x512xf32, #tpu.memory_space<vmem>>, vector<1x512xf32>
    tpu.vector_store %arg3[%c0_2, %c0_3], %2 {strides = array<i32>} : memref<2x512xf32, #tpu.memory_space<vmem>>, vector<1x512xf32>,
    %4 = vector.broadcast %1 : f32 to vector<1x512xf32>
    %5 = arith.mulf %4, %2 : vector<1x512xf32>
    %6 = vector.broadcast %0 : f32 to vector<1x512xf32>
    %7 = arith.subf %6, %5 : vector<1x512xf32>
    %c1_4 = arith.constant 1 : index
    %c0_5 = arith.constant 0 : index
    %8 = vector.load %arg3[%c1_4, %c0_5] : memref<2x512xf32, #tpu.memory_space<vmem>>, vector<1x512xf32>
    tpu.vector_store %arg3[%c1_4, %c0_5], %7 {strides = array<i32>} : memref<2x512xf32, #tpu.memory_space<vmem>>, vector<1x512xf32>,
    return
  }
  func.func @transform_0(%arg0: i32) -> i32 {
    %c0_i32 = arith.constant 0 : i32
    %c0_i32_0 = arith.constant 0 : i32
    return %c0_i32 : i32
  }
  func.func @transform_1(%arg0: i32) -> (i32, i32) {
    %c0_i32 = arith.constant 0 : i32
    %c0_i32_0 = arith.constant 0 : i32
    return %c0_i32, %arg0 : i32, i32
  }
  func.func @transform_2(%arg0: i32) -> (i32, i32) {
    %c0_i32 = arith.constant 0 : i32
    %c0_i32_0 = arith.constant 0 : i32
    return %c0_i32, %arg0 : i32, i32
  }
}

</mosaic_0001>

<llo_original>
// kernel: tpu_custom_call.1
$region0: #{tpu_custom_call.1}
  #allocation0 [shape = 'u32[]', space=smem, size = 0x4, offset = 0x4, fixed_abs, tag = 'smem constant byte address 0x4 - core index']
  #allocation1 [shape = 'u32[144,128]{1,0:T(1,128)}', space=vmem, size = 0x12000, scoped, tag = 'internal scratch']
  %s0 = inlined_call_operand.hbm [shape: f32[2], index: 0, kind: input, shape index: {}]
  %s1 = inlined_call_operand.hbm [shape: f32[2,512], index: 1, kind: input, shape index: {}]
  %s2 = inlined_call_operand.hbm [shape: f32[2,512], index: 2, kind: output, shape index: {}]
  %s3 = sld [smem:[#allocation0]]
  $region26: #{tpu_custom_call.1} parent=0
    _
  %s5 = ssub.s32 1, %s3
  %s6 = scalar_select 0, %s5, %s3
  $region1: #{tpu_custom_call.1} parent=0
    #allocation2 [shape = 'u8[512]{0}', space=smem, size = 0x200, scoped, tag = 'input window, operand 0, single buffered']
    #allocation3 [shape = 's32[1]{0}', space=sflag, size = 0x4, scoped, tag = 'scoped memory for tpu_custom_call.1']
    #allocation4 [shape = 's32[1]{0}', space=sflag, size = 0x4, scoped, tag = 'scoped memory for tpu_custom_call.1']
    #allocation5 [shape = 's32[1]{0}', space=sflag, size = 0x4, scoped, tag = 'scoped memory for tpu_custom_call.1']
    #allocation6 [shape = 'u8[4096]{0}', space=vmem, size = 0x1000, scoped, tag = 'input window, operand 1, single buffered']
    #allocation7 [shape = 'u8[4096]{0}', space=vmem, size = 0x1000, scoped, tag = 'output window, operand 0, single buffered']
    %7 = vsyncpa [#allocation5], 0
    %8 = vsyncpa [#allocation3], 0
    %9 = vsyncpa [#allocation4], 0
    // Predicated region
    $region2: #{tpu_custom_call.1} parent=1 // pred_check
      _
    $region3: #{tpu_custom_call.1} parent=1 // pred_check_branch
      %11 = sbr.rel (0) target = $region5
    $region4: #{tpu_custom_call.1} parent=1 // pred_region
      %s13 = ssub.s32 16, 16
      %14 = vsyncadd [#allocation5], %s13
      %17 = dma.hbm_to_smem %s0, 16, [#allocation2], [#allocation5]
    $region5: #{tpu_custom_call.1} parent=1 // pred_fallthru
      _
    // Predicated region
    $region6: #{tpu_custom_call.1} parent=1 // pred_check
      _
    $region7: #{tpu_custom_call.1} parent=1 // pred_check_branch
      %19 = sbr.rel (0) target = $region9
    $region8: #{tpu_custom_call.1} parent=1 // pred_region
      %s21 = ssub.s32 128, 128
      %22 = vsyncadd [#allocation3], %s21
      %s24 = sshll.u32 [#allocation6], 4
      %s25 = int_to_ptr.vmem [resolvable:$true] %s24
      %27 = dma.hbm_to_vmem [thread:$0]  %s1, 128, %s25, [#allocation3]
    $region9: #{tpu_custom_call.1} parent=1 // pred_fallthru
      _
    // Predicated region
    $region10: #{tpu_custom_call.1} parent=1 // pred_check
      _
    $region11: #{tpu_custom_call.1} parent=1 // pred_check_branch
      %29 = sbr.rel (0) target = $region13
    $region12: #{tpu_custom_call.1} parent=1 // pred_region
      %30 = dma.done [#allocation5], 16
    $region13: #{tpu_custom_call.1} parent=1 // pred_fallthru
      _
    // Predicated region
    $region14: #{tpu_custom_call.1} parent=1 // pred_check
      _
    $region15: #{tpu_custom_call.1} parent=1 // pred_check_branch
      %32 = sbr.rel (0) target = $region17
    $region16: #{tpu_custom_call.1} parent=1 // pred_region
      %33 = dma.done [#allocation3], 128
    $region17: #{tpu_custom_call.1} parent=1 // pred_fallthru
      _
    %34 = sfence
    %s35 = sld [smem:[#allocation2]]
    %s36 = sld [smem:[#allocation2 + $0x1]]
    %s37 = scalar_lea.vmem [#allocation6], 1
    %v38 = vld [vmem:[%s37] ss:$2 sm:$0xf]
    %v39 = vlaneseq
    %vm40 = vcmp.ge.s32.totalorder %v39, 0
    %vm41 = vcmp.lt.s32.totalorder %v39, 512
    %vm42 = vmand %vm40, %vm41
    %43 = vst.msk [vmem:[#allocation7] ss:$2 sm:$0xf] %vm42, %v38
    %v44 = vstv %s36
    %v45 = vmul.f32 %v44, %v38
    %v46 = vstv %s35
    %v47 = vsub.f32 %v46, %v45
    %s48 = scalar_lea.vmem [#allocation7], 1
    %49 = vst.msk [vmem:[%s48] ss:$2 sm:$0xf] %vm42, %v47
    // Predicated region
    $region18: #{tpu_custom_call.1} parent=1 // pred_check
      _
    $region19: #{tpu_custom_call.1} parent=1 // pred_check_branch
      %51 = sbr.rel (0) target = $region21
    $region20: #{tpu_custom_call.1} parent=1 // pred_region
      %s53 = ssub.s32 128, 128
      %54 = vsyncadd [#allocation4], %s53
      %s56 = sshll.u32 [#allocation7], 4
      %s57 = int_to_ptr.vmem [resolvable:$true] %s56
      %59 = dma.vmem_to_hbm [thread:$0]  %s57, 128, %s2, [#allocation4]
    $region21: #{tpu_custom_call.1} parent=1 // pred_fallthru
      _
    // Predicated region
    $region22: #{tpu_custom_call.1} parent=1 // pred_check
      _
    $region23: #{tpu_custom_call.1} parent=1 // pred_check_branch
      %61 = sbr.rel (0) target = $region25
    $region24: #{tpu_custom_call.1} parent=1 // pred_region
      %62 = dma.done [#allocation4], 128
    $region25: #{tpu_custom_call.1} parent=1 // pred_fallthru
      _
    %63 = vsyncpa [#allocation3], 1
    %64 = vsyncpa [#allocation4], 1
    %65 = vsyncpa [#allocation5], 1

</llo_original>
